<compile_context>
chip_gen: v7x
topology: tpu7x:2x2x1
jax: 0.10.0
libtpu: 0.0.40
codegen_flags: <defaults>
</compile_context>

<pallas_src>
import functools

import jax
import jax.numpy as jnp
from jax import lax
from jax.experimental import pallas as pl
from jax.experimental.pallas import tpu as pltpu

_TOK_LANES = 128  # lane-dense width of the token output slab


# ---------------------------------------------------------------------------
# Single fused kernel:
#   emb    = cast_bf16(x) @ w_enc  (+ fused text-emb/bias add)      [M, D] f32
#   seq    = mean over panels 0..P-2 of emb (per batch row)         [B, D] f32
#   logits = cast_bf16(seq) @ w_dec + b_dec                         [B, L*V]
#   tokens = per-position greedy argmax -> lane-dense (B, 128) i32
# ---------------------------------------------------------------------------
def _fused_forward_kernel(x_ref, w_enc_ref, add_ref, w_dec_ref, b_dec_ref,
                          emb_ref, tok_ref, *, B, P, L, V):
    D = w_enc_ref.shape[1]

    # ---- encoder matmul (bf16 MXU inputs, f32 accumulation) --------------
    x = x_ref[...].astype(jnp.bfloat16)                     # in-kernel cast
    emb = jnp.dot(x, w_enc_ref[...], preferred_element_type=jnp.float32)
    emb = emb + add_ref[...]                                 # text-emb + bias
    emb_ref[...] = emb

    # ---- seq embedding: mean over the first P-1 panels per batch ---------
    emb3 = emb.reshape(B, P, D)                              # tile-aligned
    seq = jnp.mean(emb3[:, :P - 1, :], axis=1)               # [B, D] f32

    # ---- decoder matmul + bias -------------------------------------------
    logits = jnp.dot(seq.astype(jnp.bfloat16), w_dec_ref[...],
                     preferred_element_type=jnp.float32) + b_dec_ref[...]

    # ---- greedy argmax per position, lane-dense output --------------------
    lane = lax.broadcasted_iota(jnp.int32, (B, _TOK_LANES), 1)
    toks = jnp.zeros((B, _TOK_LANES), jnp.int32)
    for l in range(L):                                       # static, L small
        chunk = logits[:, l * V:(l + 1) * V]                 # [B, V] lanes
        mx = jnp.max(chunk, axis=-1, keepdims=True)
        idx = lax.broadcasted_iota(jnp.int32, chunk.shape, 1)
        cand = jnp.where(chunk == mx, idx, V)                # first-max break
        am = jnp.min(cand, axis=-1, keepdims=True)           # [B, 1] int32
        toks = jnp.where(lane == l, am, toks)                # place at lane l
    tok_ref[...] = toks


def fused_forward(x, w_enc, add, w_dec, b_dec, *, B, P, L, V):
    """x:[M,K] f32, w_enc:[K,D] bf16, add:[M,D] f32, w_dec:[D,L*V] bf16,
    b_dec:[1,L*V] f32 -> (emb [M,D] f32, tokens_dense [B,128] int32)."""
    M, K = x.shape
    K2, D = w_enc.shape
    D2, N = w_dec.shape
    assert K == K2 and D == D2 and N == L * V
    assert M == B * P and add.shape == (M, D) and b_dec.shape == (1, N)
    assert L <= _TOK_LANES

    return pl.pallas_call(
        functools.partial(_fused_forward_kernel, B=B, P=P, L=L, V=V),
        out_shape=(jax.ShapeDtypeStruct((M, D), jnp.float32),
                   jax.ShapeDtypeStruct((B, _TOK_LANES), jnp.int32)),
        grid_spec=pltpu.PrefetchScalarGridSpec(
            num_scalar_prefetch=0,
            grid=(1,),
            in_specs=[
                pl.BlockSpec((M, K), lambda i: (0, 0)),      # panels (flat)
                pl.BlockSpec((K, D), lambda i: (0, 0)),      # encoder weight
                pl.BlockSpec((M, D), lambda i: (0, 0)),      # fused add
                pl.BlockSpec((D, N), lambda i: (0, 0)),      # decoder weight
                pl.BlockSpec((1, N), lambda i: (0, 0)),      # decoder bias
            ],
            out_specs=(
                pl.BlockSpec((M, D), lambda i: (0, 0)),              # emb
                pl.BlockSpec((B, _TOK_LANES), lambda i: (0, 0)),     # tokens
            ),
        ),
        compiler_params=pltpu.CompilerParams(
            dimension_semantics=("arbitrary",)),
    )(x, w_enc, add, w_dec, b_dec)


# ---------------------------------------------------------------------------
# Concrete BaseModel
# ---------------------------------------------------------------------------
class BaseModelPallas:
    def __init__(self, *, num_panels=8, in_ch=1, hw=16, hidden=128,
                 vocab=128, text_len=8, seed=0):
        self.P = num_panels
        self.C = in_ch
        self.H = self.W = hw
        self.D = hidden
        self.V = vocab
        self.L = text_len

        k = jax.random.PRNGKey(seed)
        k1, k2, k3, k4 = jax.random.split(k, 4)
        K = self.C * self.H * self.W
        # Encoder params (weights stored bf16; f32 accumulation in-kernel).
        self.w_enc = (jax.random.normal(k1, (K, self.D), jnp.float32)
                      * (K ** -0.5)).astype(jnp.bfloat16)
        self.b_enc = jnp.zeros((self.D,), jnp.float32)
        self.tok_emb = jax.random.normal(k2, (self.V, self.D), jnp.float32) * 0.02
        # Decoder params: hidden -> L * V logits.
        self.w_dec = (jax.random.normal(k3, (self.D, self.L * self.V),
                                        jnp.float32)
                      * (self.D ** -0.5)).astype(jnp.bfloat16)
        self.b_dec = jax.random.normal(k4, (self.L * self.V,), jnp.float32) * 0.01

        # Jit the whole forward: the single pallas_call + tiny glue (gather,
        # mean, reshapes, slices) fuse into one XLA program.
        self._jit_forward = jax.jit(self._forward_impl)

    # ---- full forward (mirrors BaseModel.forward) ------------------------
    def _forward_impl(self, panels, text):
        # panels: [B, P, C, H, W] f32   text: [B, P, 1, L] int32
        B, P, C, H, W = panels.shape
        assert (P, C, H, W) == (self.P, self.C, self.H, self.W)

        # Flatten panels; the bf16 cast happens inside the kernel.
        x = panels.reshape(B * P, C * H * W)

        # Text-token embedding lookup (tiny XLA gather, fused under jit);
        # the bias is folded into this fused add term.
        tok_ids = text[:, :, 0, :]                               # [B, P, L]
        text_emb = jnp.take(self.tok_emb, tok_ids, axis=0)       # [B, P, L, D]
        add = jnp.mean(text_emb, axis=2) + self.b_enc            # [B, P, D]

        emb_flat, tok_dense = fused_forward(
            x, self.w_enc, add.reshape(B * P, self.D),
            self.w_dec, self.b_dec.reshape(1, self.L * self.V),
            B=B, P=P, L=self.L, V=self.V)

        embeddings = emb_flat.reshape(B, P, self.D)              # [B, P, D]
        gt_embedding = embeddings[:, -1, :]                      # [B, D]
        decoded_tokens = tok_dense[:, :self.L]                   # [B, L] int32

        # TODO(synk): tokenizer.decode() (id -> string) has no Pallas/JAX
        # equivalent; return the token ids as the "text" stand-in.
        # TODO(synk): the reference Decoder's use of gt_token_id
        # (text[:, -1, 0, :]) is unspecified; greedy decoding ignores it here.
        decoded_texts = decoded_tokens
        return embeddings, gt_embedding, decoded_tokens, decoded_texts

    def forward(self, panels, text):
        return self._jit_forward(panels, text)


# ---------------------------------------------------------------------------
if __name__ == "__main__":
    B, P, C, H, W = 2, 8, 1, 16, 16
    L, V = 8, 128

    key = jax.random.PRNGKey(0)
    kp, kt = jax.random.split(key)
    panels = jax.random.normal(kp, (B, P, C, H, W), jnp.float32)
    text = jax.random.randint(kt, (B, P, 1, L), 0, V, dtype=jnp.int32)

    model = BaseModelPallas(num_panels=P, in_ch=C, hw=H, hidden=128,
                            vocab=V, text_len=L, seed=0)

    embeddings, gt_embedding, tokens, texts = model.forward(panels, text)
    jax.block_until_ready((embeddings, gt_embedding, tokens, texts))

    assert embeddings.shape == (B, P, 128)
    assert gt_embedding.shape == (B, 128)
    assert tokens.shape == (B, L) and tokens.dtype == jnp.int32
    assert bool(jnp.all((tokens >= 0) & (tokens < V)))
    assert bool(jnp.allclose(gt_embedding, embeddings[:, -1, :]))
    print("KERNEL_OK")
</pallas_src>

<mosaic_0001>
module attributes {stable_mosaic.version = 11 : i64} {
  func.func @_fused_forward_kernel(%arg0: i32, %arg1: memref<16x256xf32, #tpu.memory_space<vmem>>, %arg2: memref<256x128xbf16, #tpu.memory_space<vmem>>, %arg3: memref<16x128xf32, #tpu.memory_space<vmem>>, %arg4: memref<128x1024xbf16, #tpu.memory_space<vmem>>, %arg5: memref<1x1024xf32, #tpu.memory_space<vmem>>, %arg6: memref<16x128xf32, #tpu.memory_space<vmem>>, %arg7: memref<2x128xi32, #tpu.memory_space<vmem>>) attributes {dimension_semantics = [#tpu.dimension_semantics<arbitrary>], iteration_bounds = array<i64: 1>, scalar_prefetch = 0 : i64, scratch_operands = 0 : i64, tpu.core_type = #tpu.core_type<tc>, window_params = [{pipeline_mode = #tpu.pipeline_mode<synchronous>, transform_indices = @transform_0, window_bounds = array<i64: 16, 256>}, {pipeline_mode = #tpu.pipeline_mode<synchronous>, transform_indices = @transform_1, window_bounds = array<i64: 256, 128>}, {pipeline_mode = #tpu.pipeline_mode<synchronous>, transform_indices = @transform_2, window_bounds = array<i64: 16, 128>}, {pipeline_mode = #tpu.pipeline_mode<synchronous>, transform_indices = @transform_3, window_bounds = array<i64: 128, 1024>}, {pipeline_mode = #tpu.pipeline_mode<synchronous>, transform_indices = @transform_4, window_bounds = array<i64: 1, 1024>}, {pipeline_mode = #tpu.pipeline_mode<synchronous>, transform_indices = @transform_5, window_bounds = array<i64: 16, 128>}, {pipeline_mode = #tpu.pipeline_mode<synchronous>, transform_indices = @transform_6, window_bounds = array<i64: 2, 128>}]} {
    %c0 = arith.constant 0 : index
    %c0_0 = arith.constant 0 : index
    %0 = vector.load %arg1[%c0, %c0_0] : memref<16x256xf32, #tpu.memory_space<vmem>>, vector<16x256xf32>
    %1 = arith.truncf %0 : vector<16x256xf32> to vector<16x256xbf16>
    %c0_1 = arith.constant 0 : index
    %c0_2 = arith.constant 0 : index
    %2 = vector.load %arg2[%c0_1, %c0_2] : memref<256x128xbf16, #tpu.memory_space<vmem>>, vector<256x128xbf16>
    %cst = arith.constant dense<0.000000e+00> : vector<16x128xf32>
    %3 = tpu.matmul %1, %2, %cst {dimension_numbers = #tpu.dot_dimension_numbers<[1], [0], [0], [1], [0, 0, 1, 1], [], []>} : vector<16x256xbf16>, vector<256x128xbf16>, vector<16x128xf32> -> vector<16x128xf32>
    %c0_3 = arith.constant 0 : index
    %c0_4 = arith.constant 0 : index
    %4 = vector.load %arg3[%c0_3, %c0_4] : memref<16x128xf32, #tpu.memory_space<vmem>>, vector<16x128xf32>
    %5 = arith.addf %3, %4 : vector<16x128xf32>
    %c0_5 = arith.constant 0 : index
    %c0_6 = arith.constant 0 : index
    %6 = vector.load %arg6[%c0_5, %c0_6] : memref<16x128xf32, #tpu.memory_space<vmem>>, vector<16x128xf32>
    tpu.vector_store %arg6[%c0_5, %c0_6], %5 {strides = array<i32>} : memref<16x128xf32, #tpu.memory_space<vmem>>, vector<16x128xf32>,
    %7 = vector.shape_cast %5 : vector<16x128xf32> to vector<2x8x128xf32>
    %8 = vector.extract_strided_slice %7 {offsets = [0, 0, 0], sizes = [2, 7, 128], strides = [1, 1, 1]} : vector<2x8x128xf32> to vector<2x7x128xf32>
    %cst_7 = arith.constant dense<0.000000e+00> : vector<2x128xf32>
    %9 = vector.multi_reduction <add>, %8, %cst_7 [1] : vector<2x7x128xf32> to vector<2x128xf32>
    %cst_8 = arith.constant 7.000000e+00 : f32
    %10 = vector.broadcast %cst_8 : f32 to vector<2x128xf32>
    %11 = arith.divf %9, %10 : vector<2x128xf32>
    %12 = arith.truncf %11 : vector<2x128xf32> to vector<2x128xbf16>
    %c0_9 = arith.constant 0 : index
    %c0_10 = arith.constant 0 : index
    %13 = vector.load %arg4[%c0_9, %c0_10] : memref<128x1024xbf16, #tpu.memory_space<vmem>>, vector<128x1024xbf16>
    %cst_11 = arith.constant dense<0.000000e+00> : vector<2x1024xf32>
    %14 = tpu.matmul %12, %13, %cst_11 {dimension_numbers = #tpu.dot_dimension_numbers<[1], [0], [0], [1], [0, 0, 1, 1], [], []>} : vector<2x128xbf16>, vector<128x1024xbf16>, vector<2x1024xf32> -> vector<2x1024xf32>
    %c0_12 = arith.constant 0 : index
    %c0_13 = arith.constant 0 : index
    %15 = vector.load %arg5[%c0_12, %c0_13] : memref<1x1024xf32, #tpu.memory_space<vmem>>, vector<1x1024xf32>
    %16 = vector.broadcast %15 : vector<1x1024xf32> to vector<2x1024xf32>
    %17 = arith.addf %14, %16 : vector<2x1024xf32>
    %18 = tpu.iota {dimensions = array<i32: 1>} : vector<2x128xi32>
    %c0_i32 = arith.constant 0 : i32
    %19 = vector.broadcast %c0_i32 : i32 to vector<2x128xi32>
    %20 = vector.extract_strided_slice %17 {offsets = [0, 0], sizes = [2, 128], strides = [1, 1]} : vector<2x1024xf32> to vector<2x128xf32>
    %cst_14 = arith.constant dense<0xFF800000> : vector<2xf32>
    %21 = vector.multi_reduction <maximumf>, %20, %cst_14 [1] : vector<2x128xf32> to vector<2xf32>
    %22 = vector.shape_cast %21 : vector<2xf32> to vector<2x1xf32>
    %23 = tpu.iota {dimensions = array<i32: 1>} : vector<2x128xi32>
    %24 = vector.broadcast %22 : vector<2x1xf32> to vector<2x128xf32>
    %25 = arith.cmpf oeq, %20, %24 : vector<2x128xf32>
    %c128_i32 = arith.constant 128 : i32
    %26 = vector.broadcast %c128_i32 : i32 to vector<2x128xi32>
    %27 = arith.select %25, %23, %26 : vector<2x128xi1>, vector<2x128xi32>
    %cst_15 = arith.constant dense<2147483647> : vector<2xi32>
    %28 = vector.multi_reduction <minsi>, %27, %cst_15 [1] : vector<2x128xi32> to vector<2xi32>
    %29 = vector.shape_cast %28 : vector<2xi32> to vector<2x1xi32>
    %c0_i32_16 = arith.constant 0 : i32
    %30 = vector.broadcast %c0_i32_16 : i32 to vector<2x128xi32>
    %31 = arith.cmpi eq, %18, %30 : vector<2x128xi32>
    %32 = vector.shape_cast %29 : vector<2x1xi32> to vector<2x1xi32>
    %33 = vector.broadcast %32 : vector<2x1xi32> to vector<2x128xi32>
    %34 = arith.select %31, %33, %19 : vector<2x128xi1>, vector<2x128xi32>
    %35 = vector.extract_strided_slice %17 {offsets = [0, 128], sizes = [2, 128], strides = [1, 1]} : vector<2x1024xf32> to vector<2x128xf32>
    %cst_17 = arith.constant dense<0xFF800000> : vector<2xf32>
    %36 = vector.multi_reduction <maximumf>, %35, %cst_17 [1] : vector<2x128xf32> to vector<2xf32>
    %37 = vector.shape_cast %36 : vector<2xf32> to vector<2x1xf32>
    %38 = tpu.iota {dimensions = array<i32: 1>} : vector<2x128xi32>
    %39 = vector.broadcast %37 : vector<2x1xf32> to vector<2x128xf32>
    %40 = arith.cmpf oeq, %35, %39 : vector<2x128xf32>
    %c128_i32_18 = arith.constant 128 : i32
    %41 = vector.broadcast %c128_i32_18 : i32 to vector<2x128xi32>
    %42 = arith.select %40, %38, %41 : vector<2x128xi1>, vector<2x128xi32>
    %cst_19 = arith.constant dense<2147483647> : vector<2xi32>
    %43 = vector.multi_reduction <minsi>, %42, %cst_19 [1] : vector<2x128xi32> to vector<2xi32>
    %44 = vector.shape_cast %43 : vector<2xi32> to vector<2x1xi32>
    %c1_i32 = arith.constant 1 : i32
    %45 = vector.broadcast %c1_i32 : i32 to vector<2x128xi32>
    %46 = arith.cmpi eq, %18, %45 : vector<2x128xi32>
    %47 = vector.shape_cast %44 : vector<2x1xi32> to vector<2x1xi32>
    %48 = vector.broadcast %47 : vector<2x1xi32> to vector<2x128xi32>
    %49 = arith.select %46, %48, %34 : vector<2x128xi1>, vector<2x128xi32>
    %50 = vector.extract_strided_slice %17 {offsets = [0, 256], sizes = [2, 128], strides = [1, 1]} : vector<2x1024xf32> to vector<2x128xf32>
    %cst_20 = arith.constant dense<0xFF800000> : vector<2xf32>
    %51 = vector.multi_reduction <maximumf>, %50, %cst_20 [1] : vector<2x128xf32> to vector<2xf32>
    %52 = vector.shape_cast %51 : vector<2xf32> to vector<2x1xf32>
    %53 = tpu.iota {dimensions = array<i32: 1>} : vector<2x128xi32>
    %54 = vector.broadcast %52 : vector<2x1xf32> to vector<2x128xf32>
    %55 = arith.cmpf oeq, %50, %54 : vector<2x128xf32>
    %c128_i32_21 = arith.constant 128 : i32
    %56 = vector.broadcast %c128_i32_21 : i32 to vector<2x128xi32>
    %57 = arith.select %55, %53, %56 : vector<2x128xi1>, vector<2x128xi32>
    %cst_22 = arith.constant dense<2147483647> : vector<2xi32>
    %58 = vector.multi_reduction <minsi>, %57, %cst_22 [1] : vector<2x128xi32> to vector<2xi32>
    %59 = vector.shape_cast %58 : vector<2xi32> to vector<2x1xi32>
    %c2_i32 = arith.constant 2 : i32
    %60 = vector.broadcast %c2_i32 : i32 to vector<2x128xi32>
    %61 = arith.cmpi eq, %18, %60 : vector<2x128xi32>
    %62 = vector.shape_cast %59 : vector<2x1xi32> to vector<2x1xi32>
    %63 = vector.broadcast %62 : vector<2x1xi32> to vector<2x128xi32>
    %64 = arith.select %61, %63, %49 : vector<2x128xi1>, vector<2x128xi32>
    %65 = vector.extract_strided_slice %17 {offsets = [0, 384], sizes = [2, 128], strides = [1, 1]} : vector<2x1024xf32> to vector<2x128xf32>
    %cst_23 = arith.constant dense<0xFF800000> : vector<2xf32>
    %66 = vector.multi_reduction <maximumf>, %65, %cst_23 [1] : vector<2x128xf32> to vector<2xf32>
    %67 = vector.shape_cast %66 : vector<2xf32> to vector<2x1xf32>
    %68 = tpu.iota {dimensions = array<i32: 1>} : vector<2x128xi32>
    %69 = vector.broadcast %67 : vector<2x1xf32> to vector<2x128xf32>
    %70 = arith.cmpf oeq, %65, %69 : vector<2x128xf32>
    %c128_i32_24 = arith.constant 128 : i32
    %71 = vector.broadcast %c128_i32_24 : i32 to vector<2x128xi32>
    %72 = arith.select %70, %68, %71 : vector<2x128xi1>, vector<2x128xi32>
    %cst_25 = arith.constant dense<2147483647> : vector<2xi32>
    %73 = vector.multi_reduction <minsi>, %72, %cst_25 [1] : vector<2x128xi32> to vector<2xi32>
    %74 = vector.shape_cast %73 : vector<2xi32> to vector<2x1xi32>
    %c3_i32 = arith.constant 3 : i32
    %75 = vector.broadcast %c3_i32 : i32 to vector<2x128xi32>
    %76 = arith.cmpi eq, %18, %75 : vector<2x128xi32>
    %77 = vector.shape_cast %74 : vector<2x1xi32> to vector<2x1xi32>
    %78 = vector.broadcast %77 : vector<2x1xi32> to vector<2x128xi32>
    %79 = arith.select %76, %78, %64 : vector<2x128xi1>, vector<2x128xi32>
    %80 = vector.extract_strided_slice %17 {offsets = [0, 512], sizes = [2, 128], strides = [1, 1]} : vector<2x1024xf32> to vector<2x128xf32>
    %cst_26 = arith.constant dense<0xFF800000> : vector<2xf32>
    %81 = vector.multi_reduction <maximumf>, %80, %cst_26 [1] : vector<2x128xf32> to vector<2xf32>
    %82 = vector.shape_cast %81 : vector<2xf32> to vector<2x1xf32>
    %83 = tpu.iota {dimensions = array<i32: 1>} : vector<2x128xi32>
    %84 = vector.broadcast %82 : vector<2x1xf32> to vector<2x128xf32>
    %85 = arith.cmpf oeq, %80, %84 : vector<2x128xf32>
    %c128_i32_27 = arith.constant 128 : i32
    %86 = vector.broadcast %c128_i32_27 : i32 to vector<2x128xi32>
    %87 = arith.select %85, %83, %86 : vector<2x128xi1>, vector<2x128xi32>
    %cst_28 = arith.constant dense<2147483647> : vector<2xi32>
    %88 = vector.multi_reduction <minsi>, %87, %cst_28 [1] : vector<2x128xi32> to vector<2xi32>
    %89 = vector.shape_cast %88 : vector<2xi32> to vector<2x1xi32>
    %c4_i32 = arith.constant 4 : i32
    %90 = vector.broadcast %c4_i32 : i32 to vector<2x128xi32>
    %91 = arith.cmpi eq, %18, %90 : vector<2x128xi32>
    %92 = vector.shape_cast %89 : vector<2x1xi32> to vector<2x1xi32>
    %93 = vector.broadcast %92 : vector<2x1xi32> to vector<2x128xi32>
    %94 = arith.select %91, %93, %79 : vector<2x128xi1>, vector<2x128xi32>
    %95 = vector.extract_strided_slice %17 {offsets = [0, 640], sizes = [2, 128], strides = [1, 1]} : vector<2x1024xf32> to vector<2x128xf32>
    %cst_29 = arith.constant dense<0xFF800000> : vector<2xf32>
    %96 = vector.multi_reduction <maximumf>, %95, %cst_29 [1] : vector<2x128xf32> to vector<2xf32>
    %97 = vector.shape_cast %96 : vector<2xf32> to vector<2x1xf32>
    %98 = tpu.iota {dimensions = array<i32: 1>} : vector<2x128xi32>
    %99 = vector.broadcast %97 : vector<2x1xf32> to vector<2x128xf32>
    %100 = arith.cmpf oeq, %95, %99 : vector<2x128xf32>
    %c128_i32_30 = arith.constant 128 : i32
    %101 = vector.broadcast %c128_i32_30 : i32 to vector<2x128xi32>
    %102 = arith.select %100, %98, %101 : vector<2x128xi1>, vector<2x128xi32>
    %cst_31 = arith.constant dense<2147483647> : vector<2xi32>
    %103 = vector.multi_reduction <minsi>, %102, %cst_31 [1] : vector<2x128xi32> to vector<2xi32>
    %104 = vector.shape_cast %103 : vector<2xi32> to vector<2x1xi32>
    %c5_i32 = arith.constant 5 : i32
    %105 = vector.broadcast %c5_i32 : i32 to vector<2x128xi32>
    %106 = arith.cmpi eq, %18, %105 : vector<2x128xi32>
    %107 = vector.shape_cast %104 : vector<2x1xi32> to vector<2x1xi32>
    %108 = vector.broadcast %107 : vector<2x1xi32> to vector<2x128xi32>
    %109 = arith.select %106, %108, %94 : vector<2x128xi1>, vector<2x128xi32>
    %110 = vector.extract_strided_slice %17 {offsets = [0, 768], sizes = [2, 128], strides = [1, 1]} : vector<2x1024xf32> to vector<2x128xf32>
    %cst_32 = arith.constant dense<0xFF800000> : vector<2xf32>
    %111 = vector.multi_reduction <maximumf>, %110, %cst_32 [1] : vector<2x128xf32> to vector<2xf32>
    %112 = vector.shape_cast %111 : vector<2xf32> to vector<2x1xf32>
    %113 = tpu.iota {dimensions = array<i32: 1>} : vector<2x128xi32>
    %114 = vector.broadcast %112 : vector<2x1xf32> to vector<2x128xf32>
    %115 = arith.cmpf oeq, %110, %114 : vector<2x128xf32>
    %c128_i32_33 = arith.constant 128 : i32
    %116 = vector.broadcast %c128_i32_33 : i32 to vector<2x128xi32>
    %117 = arith.select %115, %113, %116 : vector<2x128xi1>, vector<2x128xi32>
    %cst_34 = arith.constant dense<2147483647> : vector<2xi32>
    %118 = vector.multi_reduction <minsi>, %117, %cst_34 [1] : vector<2x128xi32> to vector<2xi32>
    %119 = vector.shape_cast %118 : vector<2xi32> to vector<2x1xi32>
    %c6_i32 = arith.constant 6 : i32
    %120 = vector.broadcast %c6_i32 : i32 to vector<2x128xi32>
    %121 = arith.cmpi eq, %18, %120 : vector<2x128xi32>
    %122 = vector.shape_cast %119 : vector<2x1xi32> to vector<2x1xi32>
    %123 = vector.broadcast %122 : vector<2x1xi32> to vector<2x128xi32>
    %124 = arith.select %121, %123, %109 : vector<2x128xi1>, vector<2x128xi32>
    %125 = vector.extract_strided_slice %17 {offsets = [0, 896], sizes = [2, 128], strides = [1, 1]} : vector<2x1024xf32> to vector<2x128xf32>
    %cst_35 = arith.constant dense<0xFF800000> : vector<2xf32>
    %126 = vector.multi_reduction <maximumf>, %125, %cst_35 [1] : vector<2x128xf32> to vector<2xf32>
    %127 = vector.shape_cast %126 : vector<2xf32> to vector<2x1xf32>
    %128 = tpu.iota {dimensions = array<i32: 1>} : vector<2x128xi32>
    %129 = vector.broadcast %127 : vector<2x1xf32> to vector<2x128xf32>
    %130 = arith.cmpf oeq, %125, %129 : vector<2x128xf32>
    %c128_i32_36 = arith.constant 128 : i32
    %131 = vector.broadcast %c128_i32_36 : i32 to vector<2x128xi32>
    %132 = arith.select %130, %128, %131 : vector<2x128xi1>, vector<2x128xi32>
    %cst_37 = arith.constant dense<2147483647> : vector<2xi32>
    %133 = vector.multi_reduction <minsi>, %132, %cst_37 [1] : vector<2x128xi32> to vector<2xi32>
    %134 = vector.shape_cast %133 : vector<2xi32> to vector<2x1xi32>
    %c7_i32 = arith.constant 7 : i32
    %135 = vector.broadcast %c7_i32 : i32 to vector<2x128xi32>
    %136 = arith.cmpi eq, %18, %135 : vector<2x128xi32>
    %137 = vector.shape_cast %134 : vector<2x1xi32> to vector<2x1xi32>
    %138 = vector.broadcast %137 : vector<2x1xi32> to vector<2x128xi32>
    %139 = arith.select %136, %138, %124 : vector<2x128xi1>, vector<2x128xi32>
    %c0_38 = arith.constant 0 : index
    %c0_39 = arith.constant 0 : index
    %140 = vector.load %arg7[%c0_38, %c0_39] : memref<2x128xi32, #tpu.memory_space<vmem>>, vector<2x128xi32>
    tpu.vector_store %arg7[%c0_38, %c0_39], %139 {strides = array<i32>} : memref<2x128xi32, #tpu.memory_space<vmem>>, vector<2x128xi32>,
    return
  }
  func.func @transform_0(%arg0: i32) -> (i32, i32) {
    %c0_i32 = arith.constant 0 : i32
    %c0_i32_0 = arith.constant 0 : i32
    %c0_i32_1 = arith.constant 0 : i32
    return %c0_i32, %c0_i32_0 : i32, i32
  }
  func.func @transform_1(%arg0: i32) -> (i32, i32) {
    %c0_i32 = arith.constant 0 : i32
    %c0_i32_0 = arith.constant 0 : i32
    %c0_i32_1 = arith.constant 0 : i32
    return %c0_i32, %c0_i32_0 : i32, i32
  }
  func.func @transform_2(%arg0: i32) -> (i32, i32) {
    %c0_i32 = arith.constant 0 : i32
    %c0_i32_0 = arith.constant 0 : i32
    %c0_i32_1 = arith.constant 0 : i32
    return %c0_i32, %c0_i32_0 : i32, i32
  }
  func.func @transform_3(%arg0: i32) -> (i32, i32) {
    %c0_i32 = arith.constant 0 : i32
    %c0_i32_0 = arith.constant 0 : i32
    %c0_i32_1 = arith.constant 0 : i32
    return %c0_i32, %c0_i32_0 : i32, i32
  }
  func.func @transform_4(%arg0: i32) -> (i32, i32) {
    %c0_i32 = arith.constant 0 : i32
    %c0_i32_0 = arith.constant 0 : i32
    %c0_i32_1 = arith.constant 0 : i32
    return %c0_i32, %c0_i32_0 : i32, i32
  }
  func.func @transform_5(%arg0: i32) -> (i32, i32) {
    %c0_i32 = arith.constant 0 : i32
    %c0_i32_0 = arith.constant 0 : i32
    %c0_i32_1 = arith.constant 0 : i32
    return %c0_i32, %c0_i32_0 : i32, i32
  }
  func.func @transform_6(%arg0: i32) -> (i32, i32) {
    %c0_i32 = arith.constant 0 : i32
    %c0_i32_0 = arith.constant 0 : i32
    %c0_i32_1 = arith.constant 0 : i32
    return %c0_i32, %c0_i32_0 : i32, i32
  }
}

</mosaic_0001>

<llo_original>
// kernel: _forward_impl.1
$region0: #{_forward_impl.1}
  #allocation0 [shape = 'u32[]', space=smem, size = 0x4, offset = 0x4, fixed_abs, tag = 'smem constant byte address 0x4 - core index']
  #allocation1 [shape = 'u32[144,128]{1,0:T(1,128)}', space=vmem, size = 0x12000, scoped, tag = 'internal scratch']
  %s0 = inlined_call_operand.vmem [shape: f32[16,256], index: 0, kind: input, shape index: {}]
  %s1 = inlined_call_operand.vmem [shape: bf16[256,128], index: 1, kind: input, shape index: {}]
  %s2 = inlined_call_operand.vmem [shape: f32[16,128], index: 2, kind: input, shape index: {}]
  %s3 = inlined_call_operand.vmem [shape: bf16[128,1024], index: 3, kind: input, shape index: {}]
  %s4 = inlined_call_operand.vmem [shape: f32[1,1024], index: 4, kind: input, shape index: {}]
  %s5 = inlined_call_operand.vmem [shape: f32[16,128], index: 5, kind: output, shape index: {0}]
  %s6 = inlined_call_operand.vmem [shape: s32[2,128], index: 6, kind: output, shape index: {1}]
  %7 = xla_tuple %s5, %s6
  %s8 = sld [smem:[#allocation0]]
  $region38: #{_forward_impl.1} parent=0
    _
  %s10 = ssub.s32 1, %s8
  %s11 = scalar_select 0, %s10, %s8
  // Predicated region
  $region2: #{_forward_impl.1} parent=0 // pred_check
    _
  $region3: #{_forward_impl.1} parent=0 // pred_check_branch
    %13 = sbr.rel (0) target = $region5
  $region4: #{_forward_impl.1} parent=0 // pred_region
    _
  $region5: #{_forward_impl.1} parent=0 // pred_fallthru
    _
  // Predicated region
  $region6: #{_forward_impl.1} parent=0 // pred_check
    _
  $region7: #{_forward_impl.1} parent=0 // pred_check_branch
    %15 = sbr.rel (0) target = $region9
  $region8: #{_forward_impl.1} parent=0 // pred_region
    _
  $region9: #{_forward_impl.1} parent=0 // pred_fallthru
    _
  // Predicated region
  $region10: #{_forward_impl.1} parent=0 // pred_check
    _
  $region11: #{_forward_impl.1} parent=0 // pred_check_branch
    %17 = sbr.rel (0) target = $region13
  $region12: #{_forward_impl.1} parent=0 // pred_region
    _
  $region13: #{_forward_impl.1} parent=0 // pred_fallthru
    _
  // Predicated region
  $region14: #{_forward_impl.1} parent=0 // pred_check
    _
  $region15: #{_forward_impl.1} parent=0 // pred_check_branch
    %19 = sbr.rel (0) target = $region17
  $region16: #{_forward_impl.1} parent=0 // pred_region
    _
  $region17: #{_forward_impl.1} parent=0 // pred_fallthru
    _
  // Predicated region
  $region18: #{_forward_impl.1} parent=0 // pred_check
    _
  $region19: #{_forward_impl.1} parent=0 // pred_check_branch
    %21 = sbr.rel (0) target = $region21
  $region20: #{_forward_impl.1} parent=0 // pred_region
    _
  $region21: #{_forward_impl.1} parent=0 // pred_fallthru
    _
  %v23 = vld [vmem:[%s0] sm:$0xff]
  %v24 = vld [vmem:[%s0 + $0x8] sm:$0xff]
  %v25 = vld [vmem:[%s0 + $0x10] sm:$0xff]
  %v26 = vld [vmem:[%s0 + $0x18] sm:$0xff]
  %v27 = vpack.c.bf16 %v25, %v23
  %v28 = vpack.c.bf16 %v26, %v24
  %v29 = vld [vmem:[%s1] sm:$0xf]
  %v30 = vld [vmem:[%s1 + $0x4] sm:$0xf]
  %v31 = vld [vmem:[%s1 + $0x8] sm:$0xf]
  %v32 = vld [vmem:[%s1 + $0xc] sm:$0xf]
  %v33 = vld [vmem:[%s1 + $0x10] sm:$0xf]
  %v34 = vld [vmem:[%s1 + $0x14] sm:$0xf]
  %v35 = vld [vmem:[%s1 + $0x18] sm:$0xf]
  %v36 = vld [vmem:[%s1 + $0x1c] sm:$0xf]
  %v37 = vld [vmem:[%s1 + $0x20] sm:$0xf]
  %v38 = vld [vmem:[%s1 + $0x24] sm:$0xf]
  %v39 = vld [vmem:[%s1 + $0x28] sm:$0xf]
  %v40 = vld [vmem:[%s1 + $0x2c] sm:$0xf]
  %v41 = vld [vmem:[%s1 + $0x30] sm:$0xf]
  %v42 = vld [vmem:[%s1 + $0x34] sm:$0xf]
  %v43 = vld [vmem:[%s1 + $0x38] sm:$0xf]
  %v44 = vld [vmem:[%s1 + $0x3c] sm:$0xf]
  %v45 = vld [vmem:[%s1 + $0x40] sm:$0xf]
  %v46 = vld [vmem:[%s1 + $0x44] sm:$0xf]
  %v47 = vld [vmem:[%s1 + $0x48] sm:$0xf]
  %v48 = vld [vmem:[%s1 + $0x4c] sm:$0xf]
  %v49 = vld [vmem:[%s1 + $0x50] sm:$0xf]
  %v50 = vld [vmem:[%s1 + $0x54] sm:$0xf]
  %v51 = vld [vmem:[%s1 + $0x58] sm:$0xf]
  %v52 = vld [vmem:[%s1 + $0x5c] sm:$0xf]
  %v53 = vld [vmem:[%s1 + $0x60] sm:$0xf]
  %v54 = vld [vmem:[%s1 + $0x64] sm:$0xf]
  %v55 = vld [vmem:[%s1 + $0x68] sm:$0xf]
  %v56 = vld [vmem:[%s1 + $0x6c] sm:$0xf]
  %v57 = vld [vmem:[%s1 + $0x70] sm:$0xf]
  %v58 = vld [vmem:[%s1 + $0x74] sm:$0xf]
  %v59 = vld [vmem:[%s1 + $0x78] sm:$0xf]
  %v60 = vld [vmem:[%s1 + $0x7c] sm:$0xf]
  %v61 = vld [vmem:[%s2] sm:$0xff]
  %v62 = vld [vmem:[%s2 + $0x8] sm:$0xff]
  %v95 = vunpack.c.l.b16 %v29
  %v96 = vunpack.c.l.b16 %v30
  %v97 = vunpack.c.l.b16 %v31
  %v98 = vunpack.c.l.b16 %v32
  %v99 = vunpack.c.l.b16 %v33
  %v100 = vunpack.c.l.b16 %v34
  %v101 = vunpack.c.l.b16 %v35
  %v102 = vunpack.c.l.b16 %v36
  %v103 = vunpack.c.l.b16 %v37
  %v104 = vunpack.c.l.b16 %v38
  %v105 = vunpack.c.l.b16 %v39
  %v106 = vunpack.c.l.b16 %v40
  %v107 = vunpack.c.l.b16 %v41
  %v108 = vunpack.c.l.b16 %v42
  %v109 = vunpack.c.l.b16 %v43
  %v110 = vunpack.c.l.b16 %v44
  %v111 = vunpack.c.l.b16 %v45
  %v112 = vunpack.c.l.b16 %v46
  %v113 = vunpack.c.l.b16 %v47
  %v114 = vunpack.c.l.b16 %v48
  %v115 = vunpack.c.l.b16 %v49
  %v116 = vunpack.c.l.b16 %v50
  %v117 = vunpack.c.l.b16 %v51
  %v118 = vunpack.c.l.b16 %v52
  %v119 = vunpack.c.l.b16 %v53
  %v120 = vunpack.c.l.b16 %v54
  %v121 = vunpack.c.l.b16 %v55
  %v122 = vunpack.c.l.b16 %v56
  %v123 = vunpack.c.l.b16 %v57
  %v124 = vunpack.c.l.b16 %v58
  %v125 = vunpack.c.l.b16 %v59
  %v126 = vunpack.c.l.b16 %v60
  %v127 = vpack.c.b16 %v96, %v95
  %v128 = vpack.c.b16 %v98, %v97
  %v129 = vpack.c.b16 %v100, %v99
  %v130 = vpack.c.b16 %v102, %v101
  %v131 = vpack.c.b16 %v104, %v103
  %v132 = vpack.c.b16 %v106, %v105
  %v133 = vpack.c.b16 %v108, %v107
  %v134 = vpack.c.b16 %v110, %v109
  %v135 = vpack.c.b16 %v112, %v111
  %v136 = vpack.c.b16 %v114, %v113
  %v137 = vpack.c.b16 %v116, %v115
  %v138 = vpack.c.b16 %v118, %v117
  %v139 = vpack.c.b16 %v120, %v119
  %v140 = vpack.c.b16 %v122, %v121
  %v141 = vpack.c.b16 %v124, %v123
  %v142 = vpack.c.b16 %v126, %v125
  %159 = vmatprep.subr.bf16.mxu0 0
  %160 = vmatpush1.bf16.msra.mxu0 %v127
  %161 = vmatprep.subr.bf16.mxu0 0
  %162 = vmatpush1.bf16.msra.mxu0 %v128
  %163 = vmatprep.subr.bf16.mxu0 0
  %164 = vmatpush1.bf16.msra.mxu0 %v129
  %165 = vmatprep.subr.bf16.mxu0 0
  %166 = vmatpush1.bf16.msra.mxu0 %v130
  %167 = vmatprep.subr.bf16.mxu0 0
  %168 = vmatpush1.bf16.msra.mxu0 %v131
  %169 = vmatprep.subr.bf16.mxu0 0
  %170 = vmatpush1.bf16.msra.mxu0 %v132
  %171 = vmatprep.subr.bf16.mxu0 0
  %172 = vmatpush1.bf16.msra.mxu0 %v133
  %173 = vmatprep.subr.bf16.mxu0 0
  %174 = vmatpush1.bf16.msra.mxu0 %v134
  %175 = vmatprep.subr.bf16.mxu0 0
  %176 = vmatpush1.bf16.msra.mxu0 %v135
  %177 = vmatprep.subr.bf16.mxu0 0
  %178 = vmatpush1.bf16.msra.mxu0 %v136
  %179 = vmatprep.subr.bf16.mxu0 0
  %180 = vmatpush1.bf16.msra.mxu0 %v137
  %181 = vmatprep.subr.bf16.mxu0 0
  %182 = vmatpush1.bf16.msra.mxu0 %v138
  %183 = vmatprep.subr.bf16.mxu0 0
  %184 = vmatpush1.bf16.msra.mxu0 %v139
  %185 = vmatprep.subr.bf16.mxu0 0
  %186 = vmatpush1.bf16.msra.mxu0 %v140
  %187 = vmatprep.subr.bf16.mxu0 0
  %188 = vmatpush1.bf16.msra.mxu0 %v141
  %189 = vmatprep.subr.bf16.mxu0 0
  %190 = vmatpush1.bf16.msra.mxu0 %v142
  %191 = vmatprep.mubr.bf16.mxu0 %v28
  %192 = vmatmul.mubr.bf16.gmra.mrb[0].mxu0 %v27
  %v193 = vpop.f32.mrb[0].mxu0
  %v194 = vadd.f32 %v61, %v193
  %v195 = vpop.f32.mrb[0].mxu0
  %v196 = vpop.f32.mrb[0].mxu0
  %v197 = vadd.f32 %v62, %v196
  %v198 = vpop.f32.mrb[0].mxu0
  %199 = vdwg.mxu0
  %200 = vst [vmem:[%s5] sm:$0xff] %v194
  %201 = vst [vmem:[%s5 + $0x8] sm:$0xff] %v197
  %vm202 = vcmask 1046528
  %v203 = vsel %vm202, %v194, 0.0
  %v204 = vrot.slane %v203, 4
  %v205 = vadd.f32 %v203, %v204
  %v206 = vrot.slane %v205, 2
  %v207 = vadd.f32 %v205, %v206
  %v208 = vrot.slane %v207, 1
  %v209 = vadd.f32 %v207, %v208
  %v210 = vsel %vm202, %v197, 0.0
  %v211 = vrot.slane %v210, 4
  %v212 = vadd.f32 %v210, %v211
  %v213 = vrot.slane %v212, 2
  %v214 = vadd.f32 %v212, %v213
  %v215 = vrot.slane %v214, 1
  %v216 = vadd.f32 %v214, %v215
  %v217 = vrcp.pop 7.0
  %v218 = vmul.f32 %v209, %v217
  %v219 = vmul.f32 %v216, %v217
  %v220 = vpack.c.bf16 %v218, %v218
  %v221 = vpack.c.bf16 %v219, %v219
  %v222 = vld [vmem:[%s3] sm:$0xff]
  %v223 = vld [vmem:[%s3 + $0x8] sm:$0xff]
  %v224 = vld [vmem:[%s3 + $0x10] sm:$0xff]
  %v225 = vld [vmem:[%s3 + $0x18] sm:$0xff]
  %v226 = vld [vmem:[%s3 + $0x20] sm:$0xff]
  %v227 = vld [vmem:[%s3 + $0x28] sm:$0xff]
  %v228 = vld [vmem:[%s3 + $0x30] sm:$0xff]
  %v229 = vld [vmem:[%s3 + $0x38] sm:$0xff]
  %v230 = vld [vmem:[%s3 + $0x40] sm:$0xff]
  %v231 = vld [vmem:[%s3 + $0x48] sm:$0xff]
  %v232 = vld [vmem:[%s3 + $0x50] sm:$0xff]
  %v233 = vld [vmem:[%s3 + $0x58] sm:$0xff]
  %v234 = vld [vmem:[%s3 + $0x60] sm:$0xff]
  %v235 = vld [vmem:[%s3 + $0x68] sm:$0xff]
  %v236 = vld [vmem:[%s3 + $0x70] sm:$0xff]
  %v237 = vld [vmem:[%s3 + $0x78] sm:$0xff]
  %v238 = vld [vmem:[%s3 + $0x80] sm:$0xff]
  %v239 = vld [vmem:[%s3 + $0x88] sm:$0xff]
  %v240 = vld [vmem:[%s3 + $0x90] sm:$0xff]
  %v241 = vld [vmem:[%s3 + $0x98] sm:$0xff]
  %v242 = vld [vmem:[%s3 + $0xa0] sm:$0xff]
  %v243 = vld [vmem:[%s3 + $0xa8] sm:$0xff]
  %v244 = vld [vmem:[%s3 + $0xb0] sm:$0xff]
  %v245 = vld [vmem:[%s3 + $0xb8] sm:$0xff]
  %v246 = vld [vmem:[%s3 + $0xc0] sm:$0xff]
  %v247 = vld [vmem:[%s3 + $0xc8] sm:$0xff]
  %v248 = vld [vmem:[%s3 + $0xd0] sm:$0xff]
  %v249 = vld [vmem:[%s3 + $0xd8] sm:$0xff]
  %v250 = vld [vmem:[%s3 + $0xe0] sm:$0xff]
  %v251 = vld [vmem:[%s3 + $0xe8] sm:$0xff]
  %v252 = vld [vmem:[%s3 + $0xf0] sm:$0xff]
  %v253 = vld [vmem:[%s3 + $0xf8] sm:$0xff]
  %v254 = vld [vmem:[%s3 + $0x100] sm:$0xff]
  %v255 = vld [vmem:[%s3 + $0x108] sm:$0xff]
  %v256 = vld [vmem:[%s3 + $0x110] sm:$0xff]
  %v257 = vld [vmem:[%s3 + $0x118] sm:$0xff]
  %v258 = vld [vmem:[%s3 + $0x120] sm:$0xff]
  %v259 = vld [vmem:[%s3 + $0x128] sm:$0xff]
  %v260 = vld [vmem:[%s3 + $0x130] sm:$0xff]
  %v261 = vld [vmem:[%s3 + $0x138] sm:$0xff]
  %v262 = vld [vmem:[%s3 + $0x140] sm:$0xff]
  %v263 = vld [vmem:[%s3 + $0x148] sm:$0xff]
  %v264 = vld [vmem:[%s3 + $0x150] sm:$0xff]
  %v265 = vld [vmem:[%s3 + $0x158] sm:$0xff]
  %v266 = vld [vmem:[%s3 + $0x160] sm:$0xff]
  %v267 = vld [vmem:[%s3 + $0x168] sm:$0xff]
  %v268 = vld [vmem:[%s3 + $0x170] sm:$0xff]
  %v269 = vld [vmem:[%s3 + $0x178] sm:$0xff]
  %v270 = vld [vmem:[%s3 + $0x180] sm:$0xff]
  %v271 = vld [vmem:[%s3 + $0x188] sm:$0xff]
  %v272 = vld [vmem:[%s3 + $0x190] sm:$0xff]
  %v273 = vld [vmem:[%s3 + $0x198] sm:$0xff]
  %v274 = vld [vmem:[%s3 + $0x1a0] sm:$0xff]
  %v275 = vld [vmem:[%s3 + $0x1a8] sm:$0xff]
  %v276 = vld [vmem:[%s3 + $0x1b0] sm:$0xff]
  %v277 = vld [vmem:[%s3 + $0x1b8] sm:$0xff]
  %v278 = vld [vmem:[%s3 + $0x1c0] sm:$0xff]
  %v279 = vld [vmem:[%s3 + $0x1c8] sm:$0xff]
  %v280 = vld [vmem:[%s3 + $0x1d0] sm:$0xff]
  %v281 = vld [vmem:[%s3 + $0x1d8] sm:$0xff]
  %v282 = vld [vmem:[%s3 + $0x1e0] sm:$0xff]
  %v283 = vld [vmem:[%s3 + $0x1e8] sm:$0xff]
  %v284 = vld [vmem:[%s3 + $0x1f0] sm:$0xff]
  %v285 = vld [vmem:[%s3 + $0x1f8] sm:$0xff]
  %v286 = vld [vmem:[%s4] sm:$0xff]
  %v288 = vlaneseq
  %v289 = vshrl.u32 %v288, 7
  %v290 = vsub.s32 0, %v289
  %v291 = vrot.slane %v286, %v290
  %v292 = vlaneseq
  %v293 = vshrl.u32 %v292, 7
  %v294 = vsub.s32 1, %v293
  %v295 = vrot.slane %v286, %v294
  %v296 = vlaneseq
  %v297 = vshrl.u32 %v296, 7
  %v298 = vsub.s32 2, %v297
  %v299 = vrot.slane %v286, %v298
  %v300 = vlaneseq
  %v301 = vshrl.u32 %v300, 7
  %v302 = vsub.s32 3, %v301
  %v303 = vrot.slane %v286, %v302
  %v304 = vlaneseq
  %v305 = vshrl.u32 %v304, 7
  %v306 = vsub.s32 4, %v305
  %v307 = vrot.slane %v286, %v306
  %v308 = vlaneseq
  %v309 = vshrl.u32 %v308, 7
  %v310 = vsub.s32 5, %v309
  %v311 = vrot.slane %v286, %v310
  %v312 = vlaneseq
  %v313 = vshrl.u32 %v312, 7
  %v314 = vsub.s32 6, %v313
  %v315 = vrot.slane %v286, %v314
  %v316 = vlaneseq
  %v317 = vshrl.u32 %v316, 7
  %v318 = vsub.s32 7, %v317
  %v319 = vrot.slane %v286, %v318
  %v330 = vunpack.c.l.b16 %v220
  %v331 = vunpack.c.l.b16 %v221
  %vm332 = vcmask 1041409
  %v333 = vsel %vm332, %v331, %v330
  %v334 = vpack.c.b16 %v333, %v333
  %v400 = vunpack.c.l.b16 %v222
  %v401 = vunpack.c.h.b16 %v222
  %v402 = vunpack.c.l.b16 %v223
  %v403 = vunpack.c.h.b16 %v223
  %v404 = vunpack.c.l.b16 %v224
  %v405 = vunpack.c.h.b16 %v224
  %v406 = vunpack.c.l.b16 %v225
  %v407 = vunpack.c.h.b16 %v225
  %v408 = vunpack.c.l.b16 %v226
  %v409 = vunpack.c.h.b16 %v226
  %v410 = vunpack.c.l.b16 %v227
  %v411 = vunpack.c.h.b16 %v227
  %v412 = vunpack.c.l.b16 %v228
  %v413 = vunpack.c.h.b16 %v228
  %v414 = vunpack.c.l.b16 %v229
  %v415 = vunpack.c.h.b16 %v229
  %v416 = vunpack.c.l.b16 %v230
  %v417 = vunpack.c.h.b16 %v230
  %v418 = vunpack.c.l.b16 %v231
  %v419 = vunpack.c.h.b16 %v231
  %v420 = vunpack.c.l.b16 %v232
  %v421 = vunpack.c.h.b16 %v232
  %v422 = vunpack.c.l.b16 %v233
  %v423 = vunpack.c.h.b16 %v233
  %v424 = vunpack.c.l.b16 %v234
  %v425 = vunpack.c.h.b16 %v234
  %v426 = vunpack.c.l.b16 %v235
  %v427 = vunpack.c.h.b16 %v235
  %v428 = vunpack.c.l.b16 %v236
  %v429 = vunpack.c.h.b16 %v236
  %v430 = vunpack.c.l.b16 %v237
  %v431 = vunpack.c.h.b16 %v237
  %v432 = vunpack.c.l.b16 %v238
  %v433 = vunpack.c.h.b16 %v238
  %v434 = vunpack.c.l.b16 %v239
  %v435 = vunpack.c.h.b16 %v239
  %v436 = vunpack.c.l.b16 %v240
  %v437 = vunpack.c.h.b16 %v240
  %v438 = vunpack.c.l.b16 %v241
  %v439 = vunpack.c.h.b16 %v241
  %v440 = vunpack.c.l.b16 %v242
  %v441 = vunpack.c.h.b16 %v242
  %v442 = vunpack.c.l.b16 %v243
  %v443 = vunpack.c.h.b16 %v243
  %v444 = vunpack.c.l.b16 %v244
  %v445 = vunpack.c.h.b16 %v244
  %v446 = vunpack.c.l.b16 %v245
  %v447 = vunpack.c.h.b16 %v245
  %v448 = vunpack.c.l.b16 %v246
  %v449 = vunpack.c.h.b16 %v246
  %v450 = vunpack.c.l.b16 %v247
  %v451 = vunpack.c.h.b16 %v247
  %v452 = vunpack.c.l.b16 %v248
  %v453 = vunpack.c.h.b16 %v248
  %v454 = vunpack.c.l.b16 %v249
  %v455 = vunpack.c.h.b16 %v249
  %v456 = vunpack.c.l.b16 %v250
  %v457 = vunpack.c.h.b16 %v250
  %v458 = vunpack.c.l.b16 %v251
  %v459 = vunpack.c.h.b16 %v251
  %v460 = vunpack.c.l.b16 %v252
  %v461 = vunpack.c.h.b16 %v252
  %v462 = vunpack.c.l.b16 %v253
  %v463 = vunpack.c.h.b16 %v253
  %v464 = vunpack.c.l.b16 %v254
  %v465 = vunpack.c.h.b16 %v254
  %v466 = vunpack.c.l.b16 %v255
  %v467 = vunpack.c.h.b16 %v255
  %v468 = vunpack.c.l.b16 %v256
  %v469 = vunpack.c.h.b16 %v256
  %v470 = vunpack.c.l.b16 %v257
  %v471 = vunpack.c.h.b16 %v257
  %v472 = vunpack.c.l.b16 %v258
  %v473 = vunpack.c.h.b16 %v258
  %v474 = vunpack.c.l.b16 %v259
  %v475 = vunpack.c.h.b16 %v259
  %v476 = vunpack.c.l.b16 %v260
  %v477 = vunpack.c.h.b16 %v260
  %v478 = vunpack.c.l.b16 %v261
  %v479 = vunpack.c.h.b16 %v261
  %v480 = vunpack.c.l.b16 %v262
  %v481 = vunpack.c.h.b16 %v262
  %v482 = vunpack.c.l.b16 %v263
  %v483 = vunpack.c.h.b16 %v263
  %v484 = vunpack.c.l.b16 %v264
  %v485 = vunpack.c.h.b16 %v264
  %v486 = vunpack.c.l.b16 %v265
  %v487 = vunpack.c.h.b16 %v265
  %v488 = vunpack.c.l.b16 %v266
  %v489 = vunpack.c.h.b16 %v266
  %v490 = vunpack.c.l.b16 %v267
  %v491 = vunpack.c.h.b16 %v267
  %v492 = vunpack.c.l.b16 %v268
  %v493 = vunpack.c.h.b16 %v268
  %v494 = vunpack.c.l.b16 %v269
  %v495 = vunpack.c.h.b16 %v269
  %v496 = vunpack.c.l.b16 %v270
  %v497 = vunpack.c.h.b16 %v270
  %v498 = vunpack.c.l.b16 %v271
  %v499 = vunpack.c.h.b16 %v271
  %v500 = vunpack.c.l.b16 %v272
  %v501 = vunpack.c.h.b16 %v272
  %v502 = vunpack.c.l.b16 %v273
  %v503 = vunpack.c.h.b16 %v273
  %v504 = vunpack.c.l.b16 %v274
  %v505 = vunpack.c.h.b16 %v274
  %v506 = vunpack.c.l.b16 %v275
  %v507 = vunpack.c.h.b16 %v275
  %v508 = vunpack.c.l.b16 %v276
  %v509 = vunpack.c.h.b16 %v276
  %v510 = vunpack.c.l.b16 %v277
  %v511 = vunpack.c.h.b16 %v277
  %v512 = vunpack.c.l.b16 %v278
  %v513 = vunpack.c.h.b16 %v278
  %v514 = vunpack.c.l.b16 %v279
  %v515 = vunpack.c.h.b16 %v279
  %v516 = vunpack.c.l.b16 %v280
  %v517 = vunpack.c.h.b16 %v280
  %v518 = vunpack.c.l.b16 %v281
  %v519 = vunpack.c.h.b16 %v281
  %v520 = vunpack.c.l.b16 %v282
  %v521 = vunpack.c.h.b16 %v282
  %v522 = vunpack.c.l.b16 %v283
  %v523 = vunpack.c.h.b16 %v283
  %v524 = vunpack.c.l.b16 %v284
  %v525 = vunpack.c.h.b16 %v284
  %v526 = vunpack.c.l.b16 %v285
  %v527 = vunpack.c.h.b16 %v285
  %v528 = vpack.c.b16 %v408, %v400
  %v529 = vpack.c.b16 %v409, %v401
  %v530 = vpack.c.b16 %v410, %v402
  %v531 = vpack.c.b16 %v411, %v403
  %v532 = vpack.c.b16 %v412, %v404
  %v533 = vpack.c.b16 %v413, %v405
  %v534 = vpack.c.b16 %v414, %v406
  %v535 = vpack.c.b16 %v415, %v407
  %v536 = vpack.c.b16 %v424, %v416
  %v537 = vpack.c.b16 %v425, %v417
  %v538 = vpack.c.b16 %v426, %v418
  %v539 = vpack.c.b16 %v427, %v419
  %v540 = vpack.c.b16 %v428, %v420
  %v541 = vpack.c.b16 %v429, %v421
  %v542 = vpack.c.b16 %v430, %v422
  %v543 = vpack.c.b16 %v431, %v423
  %v544 = vpack.c.b16 %v440, %v432
  %v545 = vpack.c.b16 %v441, %v433
  %v546 = vpack.c.b16 %v442, %v434
  %v547 = vpack.c.b16 %v443, %v435
  %v548 = vpack.c.b16 %v444, %v436
  %v549 = vpack.c.b16 %v445, %v437
  %v550 = vpack.c.b16 %v446, %v438
  %v551 = vpack.c.b16 %v447, %v439
  %v552 = vpack.c.b16 %v456, %v448
  %v553 = vpack.c.b16 %v457, %v449
  %v554 = vpack.c.b16 %v458, %v450
  %v555 = vpack.c.b16 %v459, %v451
  %v556 = vpack.c.b16 %v460, %v452
  %v557 = vpack.c.b16 %v461, %v453
  %v558 = vpack.c.b16 %v462, %v454
  %v559 = vpack.c.b16 %v463, %v455
  %v560 = vpack.c.b16 %v472, %v464
  %v561 = vpack.c.b16 %v473, %v465
  %v562 = vpack.c.b16 %v474, %v466
  %v563 = vpack.c.b16 %v475, %v467
  %v564 = vpack.c.b16 %v476, %v468
  %v565 = vpack.c.b16 %v477, %v469
  %v566 = vpack.c.b16 %v478, %v470
  %v567 = vpack.c.b16 %v479, %v471
  %v568 = vpack.c.b16 %v488, %v480
  %v569 = vpack.c.b16 %v489, %v481
  %v570 = vpack.c.b16 %v490, %v482
  %v571 = vpack.c.b16 %v491, %v483
  %v572 = vpack.c.b16 %v492, %v484
  %v573 = vpack.c.b16 %v493, %v485
  %v574 = vpack.c.b16 %v494, %v486
  %v575 = vpack.c.b16 %v495, %v487
  %v576 = vpack.c.b16 %v504, %v496
  %v577 = vpack.c.b16 %v505, %v497
  %v578 = vpack.c.b16 %v506, %v498
  %v579 = vpack.c.b16 %v507, %v499
  %v580 = vpack.c.b16 %v508, %v500
  %v581 = vpack.c.b16 %v509, %v501
  %v582 = vpack.c.b16 %v510, %v502
  %v583 = vpack.c.b16 %v511, %v503
  %v584 = vpack.c.b16 %v520, %v512
  %v585 = vpack.c.b16 %v521, %v513
  %v586 = vpack.c.b16 %v522, %v514
  %v587 = vpack.c.b16 %v523, %v515
  %v588 = vpack.c.b16 %v524, %v516
  %v589 = vpack.c.b16 %v525, %v517
  %v590 = vpack.c.b16 %v526, %v518
  %v591 = vpack.c.b16 %v527, %v519
  %656 = vmatprep.subr.bf16.mxu0 %v529
  %657 = vmatpush1.bf16.msra.mxu0 %v528
  %658 = vmatprep.subr.bf16.mxu0 %v537
  %659 = vmatpush1.bf16.msra.mxu0 %v536
  %660 = vmatprep.subr.bf16.mxu0 %v545
  %661 = vmatpush1.bf16.msra.mxu0 %v544
  %662 = vmatprep.subr.bf16.mxu0 %v553
  %663 = vmatpush1.bf16.msra.mxu0 %v552
  %664 = vmatprep.subr.bf16.mxu0 %v561
  %665 = vmatpush1.bf16.msra.mxu0 %v560
  %666 = vmatprep.subr.bf16.mxu0 %v569
  %667 = vmatpush1.bf16.msra.mxu0 %v568
  %668 = vmatprep.subr.bf16.mxu0 %v577
  %669 = vmatpush1.bf16.msra.mxu0 %v576
  %670 = vmatprep.subr.bf16.mxu0 %v585
  %671 = vmatpush1.bf16.msra.mxu0 %v584
  %672 = vmatprep.subr.bf16.mxu0 0
  %673 = vmatpush1.bf16.msra.mxu0 0
  %674 = vmatprep.subr.bf16.mxu0 0
  %675 = vmatpush1.bf16.msra.mxu0 0
  %676 = vmatprep.subr.bf16.mxu0 0
  %677 = vmatpush1.bf16.msra.mxu0 0
  %678 = vmatprep.subr.bf16.mxu0 0
  %679 = vmatpush1.bf16.msra.mxu0 0
  %680 = vmatprep.subr.bf16.mxu0 0
  %681 = vmatpush1.bf16.msra.mxu0 0
  %682 = vmatprep.subr.bf16.mxu0 0
  %683 = vmatpush1.bf16.msra.mxu0 0
  %684 = vmatprep.subr.bf16.mxu0 0
  %685 = vmatpush1.bf16.msra.mxu0 0
  %686 = vmatprep.subr.bf16.mxu0 0
  %687 = vmatpush1.bf16.msra.mxu0 0
  %688 = vmatprep.mubr.bf16.mxu0 0
  %689 = vmatmul.mubr.bf16.gmra.mrb[0].mxu0 %v334
  %v690 = vpop.f32.mrb[0].mxu0
  %v691 = vadd.f32 %v291, %v690
  %v692 = vpop.f32.mrb[0].mxu0
  %v693 = vadd.f32 %v295, %v692
  %v694 = vpop.f32.mrb[0].mxu0
  %v695 = vpop.f32.mrb[0].mxu0
  %696 = vdwg.mxu0
  %697 = vmatprep.subr.bf16.mxu0 %v531
  %698 = vmatpush1.bf16.msra.mxu0 %v530
  %699 = vmatprep.subr.bf16.mxu0 %v539
  %700 = vmatpush1.bf16.msra.mxu0 %v538
  %701 = vmatprep.subr.bf16.mxu0 %v547
  %702 = vmatpush1.bf16.msra.mxu0 %v546
  %703 = vmatprep.subr.bf16.mxu0 %v555
  %704 = vmatpush1.bf16.msra.mxu0 %v554
  %705 = vmatprep.subr.bf16.mxu0 %v563
  %706 = vmatpush1.bf16.msra.mxu0 %v562
  %707 = vmatprep.subr.bf16.mxu0 %v571
  %708 = vmatpush1.bf16.msra.mxu0 %v570
  %709 = vmatprep.subr.bf16.mxu0 %v579
  %710 = vmatpush1.bf16.msra.mxu0 %v578
  %711 = vmatprep.subr.bf16.mxu0 %v587
  %712 = vmatpush1.bf16.msra.mxu0 %v586
  %713 = vmatprep.subr.bf16.mxu0 0
  %714 = vmatpush1.bf16.msra.mxu0 0
  %715 = vmatprep.subr.bf16.mxu0 0
  %716 = vmatpush1.bf16.msra.mxu0 0
  %717 = vmatprep.subr.bf16.mxu0 0
  %718 = vmatpush1.bf16.msra.mxu0 0
  %719 = vmatprep.subr.bf16.mxu0 0
  %720 = vmatpush1.bf16.msra.mxu0 0
  %721 = vmatprep.subr.bf16.mxu0 0
  %722 = vmatpush1.bf16.msra.mxu0 0
  %723 = vmatprep.subr.bf16.mxu0 0
  %724 = vmatpush1.bf16.msra.mxu0 0
  %725 = vmatprep.subr.bf16.mxu0 0
  %726 = vmatpush1.bf16.msra.mxu0 0
  %727 = vmatprep.subr.bf16.mxu0 0
  %728 = vmatpush1.bf16.msra.mxu0 0
  %729 = vmatprep.mubr.bf16.mxu0 0
  %730 = vmatmul.mubr.bf16.gmra.mrb[0].mxu0 %v334
  %v731 = vpop.f32.mrb[0].mxu0
  %v732 = vadd.f32 %v299, %v731
  %v733 = vpop.f32.mrb[0].mxu0
  %v734 = vadd.f32 %v303, %v733
  %v735 = vpop.f32.mrb[0].mxu0
  %v736 = vpop.f32.mrb[0].mxu0
  %737 = vdwg.mxu0
  %738 = vmatprep.subr.bf16.mxu0 %v533
  %739 = vmatpush1.bf16.msra.mxu0 %v532
  %740 = vmatprep.subr.bf16.mxu0 %v541
  %741 = vmatpush1.bf16.msra.mxu0 %v540
  %742 = vmatprep.subr.bf16.mxu0 %v549
  %743 = vmatpush1.bf16.msra.mxu0 %v548
  %744 = vmatprep.subr.bf16.mxu0 %v557
  %745 = vmatpush1.bf16.msra.mxu0 %v556
  %746 = vmatprep.subr.bf16.mxu0 %v565
  %747 = vmatpush1.bf16.msra.mxu0 %v564
  %748 = vmatprep.subr.bf16.mxu0 %v573
  %749 = vmatpush1.bf16.msra.mxu0 %v572
  %750 = vmatprep.subr.bf16.mxu0 %v581
  %751 = vmatpush1.bf16.msra.mxu0 %v580
  %752 = vmatprep.subr.bf16.mxu0 %v589
  %753 = vmatpush1.bf16.msra.mxu0 %v588
  %754 = vmatprep.subr.bf16.mxu0 0
  %755 = vmatpush1.bf16.msra.mxu0 0
  %756 = vmatprep.subr.bf16.mxu0 0
  %757 = vmatpush1.bf16.msra.mxu0 0
  %758 = vmatprep.subr.bf16.mxu0 0
  %759 = vmatpush1.bf16.msra.mxu0 0
  %760 = vmatprep.subr.bf16.mxu0 0
  %761 = vmatpush1.bf16.msra.mxu0 0
  %762 = vmatprep.subr.bf16.mxu0 0
  %763 = vmatpush1.bf16.msra.mxu0 0
  %764 = vmatprep.subr.bf16.mxu0 0
  %765 = vmatpush1.bf16.msra.mxu0 0
  %766 = vmatprep.subr.bf16.mxu0 0
  %767 = vmatpush1.bf16.msra.mxu0 0
  %768 = vmatprep.subr.bf16.mxu0 0
  %769 = vmatpush1.bf16.msra.mxu0 0
  %770 = vmatprep.mubr.bf16.mxu0 0
  %771 = vmatmul.mubr.bf16.gmra.mrb[0].mxu0 %v334
  %v772 = vpop.f32.mrb[0].mxu0
  %v773 = vadd.f32 %v307, %v772
  %v774 = vpop.f32.mrb[0].mxu0
  %v775 = vadd.f32 %v311, %v774
  %v776 = vpop.f32.mrb[0].mxu0
  %v777 = vpop.f32.mrb[0].mxu0
  %778 = vdwg.mxu0
  %779 = vmatprep.subr.bf16.mxu0 %v535
  %780 = vmatpush1.bf16.msra.mxu0 %v534
  %781 = vmatprep.subr.bf16.mxu0 %v543
  %782 = vmatpush1.bf16.msra.mxu0 %v542
  %783 = vmatprep.subr.bf16.mxu0 %v551
  %784 = vmatpush1.bf16.msra.mxu0 %v550
  %785 = vmatprep.subr.bf16.mxu0 %v559
  %786 = vmatpush1.bf16.msra.mxu0 %v558
  %787 = vmatprep.subr.bf16.mxu0 %v567
  %788 = vmatpush1.bf16.msra.mxu0 %v566
  %789 = vmatprep.subr.bf16.mxu0 %v575
  %790 = vmatpush1.bf16.msra.mxu0 %v574
  %791 = vmatprep.subr.bf16.mxu0 %v583
  %792 = vmatpush1.bf16.msra.mxu0 %v582
  %793 = vmatprep.subr.bf16.mxu0 %v591
  %794 = vmatpush1.bf16.msra.mxu0 %v590
  %795 = vmatprep.subr.bf16.mxu0 0
  %796 = vmatpush1.bf16.msra.mxu0 0
  %797 = vmatprep.subr.bf16.mxu0 0
  %798 = vmatpush1.bf16.msra.mxu0 0
  %799 = vmatprep.subr.bf16.mxu0 0
  %800 = vmatpush1.bf16.msra.mxu0 0
  %801 = vmatprep.subr.bf16.mxu0 0
  %802 = vmatpush1.bf16.msra.mxu0 0
  %803 = vmatprep.subr.bf16.mxu0 0
  %804 = vmatpush1.bf16.msra.mxu0 0
  %805 = vmatprep.subr.bf16.mxu0 0
  %806 = vmatpush1.bf16.msra.mxu0 0
  %807 = vmatprep.subr.bf16.mxu0 0
  %808 = vmatpush1.bf16.msra.mxu0 0
  %809 = vmatprep.subr.bf16.mxu0 0
  %810 = vmatpush1.bf16.msra.mxu0 0
  %811 = vmatprep.mubr.bf16.mxu0 0
  %812 = vmatmul.mubr.bf16.gmra.mrb[0].mxu0 %v334
  %v813 = vpop.f32.mrb[0].mxu0
  %v814 = vadd.f32 %v315, %v813
  %v815 = vpop.f32.mrb[0].mxu0
  %v816 = vadd.f32 %v319, %v815
  %v817 = vpop.f32.mrb[0].mxu0
  %v818 = vpop.f32.mrb[0].mxu0
  %819 = vdwg.mxu0
  %v820 = vlaneseq
  %v821 = vand.u32 %v820, 127
  %vm822 = vcmask 1041408
  %v823 = vsel %vm822, %v691, -inf
  %824 = vmax.xlane.f32.xlu0 %v823
  %v825 = vpop.xlane.xlu0 %824
  %vm826 = vcmp.eq.f32.partialorder %v691, %v825
  %v827 = vsel %vm826, %v821, 128
  %v828 = vsel %vm822, %v827, 2147483647
  %v829 = vand.u32 %v828, 65535
  %v830 = vshra.s32 %v828, 16
  %v831 = vcvt.s32.f32 %v829
  %v832 = vcvt.s32.f32 %v830
  %833 = vmin.xlane.f32.xlu0 %v832
  %v834 = vpop.xlane.xlu0 %833
  %vm835 = vcmp.eq.f32.partialorder %v832, %v834
  %v836 = vsel %vm835, %v831, inf
  %837 = vmin.xlane.f32.xlu0 %v836
  %v838 = vpop.xlane.xlu0 %837
  %v839 = vcvt.f32.s32 %v838
  %v840 = vcvt.f32.s32 %v834
  %v841 = vshll.u32 %v840, 16
  %v842 = vadd.s32 %v841, %v839
  %vm843 = vcmp.eq.s32.totalorder %v821, 0
  %v844 = vsel %vm843, %v842, 0
  %v845 = vsel %vm822, %v693, -inf
  %846 = vmax.xlane.f32.xlu0 %v845
  %v847 = vpop.xlane.xlu0 %846
  %vm848 = vcmp.eq.f32.partialorder %v693, %v847
  %v849 = vsel %vm848, %v821, 128
  %v850 = vsel %vm822, %v849, 2147483647
  %v851 = vand.u32 %v850, 65535
  %v852 = vshra.s32 %v850, 16
  %v853 = vcvt.s32.f32 %v851
  %v854 = vcvt.s32.f32 %v852
  %855 = vmin.xlane.f32.xlu0 %v854
  %v856 = vpop.xlane.xlu0 %855
  %vm857 = vcmp.eq.f32.partialorder %v854, %v856
  %v858 = vsel %vm857, %v853, inf
  %859 = vmin.xlane.f32.xlu0 %v858
  %v860 = vpop.xlane.xlu0 %859
  %v861 = vcvt.f32.s32 %v860
  %v862 = vcvt.f32.s32 %v856
  %v863 = vshll.u32 %v862, 16
  %v864 = vadd.s32 %v863, %v861
  %vm865 = vcmp.eq.s32.totalorder %v821, 1
  %v866 = vsel %vm865, %v864, %v844
  %v867 = vsel %vm822, %v732, -inf
  %868 = vmax.xlane.f32.xlu0 %v867
  %v869 = vpop.xlane.xlu0 %868
  %vm870 = vcmp.eq.f32.partialorder %v732, %v869
  %v871 = vsel %vm870, %v821, 128
  %v872 = vsel %vm822, %v871, 2147483647
  %v873 = vand.u32 %v872, 65535
  %v874 = vshra.s32 %v872, 16
  %v875 = vcvt.s32.f32 %v873
  %v876 = vcvt.s32.f32 %v874
  %877 = vmin.xlane.f32.xlu0 %v876
  %v878 = vpop.xlane.xlu0 %877
  %vm879 = vcmp.eq.f32.partialorder %v876, %v878
  %v880 = vsel %vm879, %v875, inf
  %881 = vmin.xlane.f32.xlu0 %v880
  %v882 = vpop.xlane.xlu0 %881
  %v883 = vcvt.f32.s32 %v882
  %v884 = vcvt.f32.s32 %v878
  %v885 = vshll.u32 %v884, 16
  %v886 = vadd.s32 %v885, %v883
  %vm887 = vcmp.eq.s32.totalorder %v821, 2
  %v888 = vsel %vm887, %v886, %v866
  %v889 = vsel %vm822, %v734, -inf
  %890 = vmax.xlane.f32.xlu0 %v889
  %v891 = vpop.xlane.xlu0 %890
  %vm892 = vcmp.eq.f32.partialorder %v734, %v891
  %v893 = vsel %vm892, %v821, 128
  %v894 = vsel %vm822, %v893, 2147483647
  %v895 = vand.u32 %v894, 65535
  %v896 = vshra.s32 %v894, 16
  %v897 = vcvt.s32.f32 %v895
  %v898 = vcvt.s32.f32 %v896
  %899 = vmin.xlane.f32.xlu0 %v898
  %v900 = vpop.xlane.xlu0 %899
  %vm901 = vcmp.eq.f32.partialorder %v898, %v900
  %v902 = vsel %vm901, %v897, inf
  %903 = vmin.xlane.f32.xlu0 %v902
  %v904 = vpop.xlane.xlu0 %903
  %v905 = vcvt.f32.s32 %v904
  %v906 = vcvt.f32.s32 %v900
  %v907 = vshll.u32 %v906, 16
  %v908 = vadd.s32 %v907, %v905
  %vm909 = vcmp.eq.s32.totalorder %v821, 3
  %v910 = vsel %vm909, %v908, %v888
  %v911 = vsel %vm822, %v773, -inf
  %912 = vmax.xlane.f32.xlu0 %v911
  %v913 = vpop.xlane.xlu0 %912
  %vm914 = vcmp.eq.f32.partialorder %v773, %v913
  %v915 = vsel %vm914, %v821, 128
  %v916 = vsel %vm822, %v915, 2147483647
  %v917 = vand.u32 %v916, 65535
  %v918 = vshra.s32 %v916, 16
  %v919 = vcvt.s32.f32 %v917
  %v920 = vcvt.s32.f32 %v918
  %921 = vmin.xlane.f32.xlu0 %v920
  %v922 = vpop.xlane.xlu0 %921
  %vm923 = vcmp.eq.f32.partialorder %v920, %v922
  %v924 = vsel %vm923, %v919, inf
  %925 = vmin.xlane.f32.xlu0 %v924
  %v926 = vpop.xlane.xlu0 %925
  %v927 = vcvt.f32.s32 %v926
  %v928 = vcvt.f32.s32 %v922
  %v929 = vshll.u32 %v928, 16
  %v930 = vadd.s32 %v929, %v927
  %vm931 = vcmp.eq.s32.totalorder %v821, 4
  %v932 = vsel %vm931, %v930, %v910
  %v933 = vsel %vm822, %v775, -inf
  %934 = vmax.xlane.f32.xlu0 %v933
  %v935 = vpop.xlane.xlu0 %934
  %vm936 = vcmp.eq.f32.partialorder %v775, %v935
  %v937 = vsel %vm936, %v821, 128
  %v938 = vsel %vm822, %v937, 2147483647
  %v939 = vand.u32 %v938, 65535
  %v940 = vshra.s32 %v938, 16
  %v941 = vcvt.s32.f32 %v939
  %v942 = vcvt.s32.f32 %v940
  %943 = vmin.xlane.f32.xlu0 %v942
  %v944 = vpop.xlane.xlu0 %943
  %vm945 = vcmp.eq.f32.partialorder %v942, %v944
  %v946 = vsel %vm945, %v941, inf
  %947 = vmin.xlane.f32.xlu0 %v946
  %v948 = vpop.xlane.xlu0 %947
  %v949 = vcvt.f32.s32 %v948
  %v950 = vcvt.f32.s32 %v944
  %v951 = vshll.u32 %v950, 16
  %v952 = vadd.s32 %v951, %v949
  %vm953 = vcmp.eq.s32.totalorder %v821, 5
  %v954 = vsel %vm953, %v952, %v932
  %v955 = vsel %vm822, %v814, -inf
  %956 = vmax.xlane.f32.xlu0 %v955
  %v957 = vpop.xlane.xlu0 %956
  %vm958 = vcmp.eq.f32.partialorder %v814, %v957
  %v959 = vsel %vm958, %v821, 128
  %v960 = vsel %vm822, %v959, 2147483647
  %v961 = vand.u32 %v960, 65535
  %v962 = vshra.s32 %v960, 16
  %v963 = vcvt.s32.f32 %v961
  %v964 = vcvt.s32.f32 %v962
  %965 = vmin.xlane.f32.xlu0 %v964
  %v966 = vpop.xlane.xlu0 %965
  %vm967 = vcmp.eq.f32.partialorder %v964, %v966
  %v968 = vsel %vm967, %v963, inf
  %969 = vmin.xlane.f32.xlu0 %v968
  %v970 = vpop.xlane.xlu0 %969
  %v971 = vcvt.f32.s32 %v970
  %v972 = vcvt.f32.s32 %v966
  %v973 = vshll.u32 %v972, 16
  %v974 = vadd.s32 %v973, %v971
  %vm975 = vcmp.eq.s32.totalorder %v821, 6
  %v976 = vsel %vm975, %v974, %v954
  %v977 = vsel %vm822, %v816, -inf
  %978 = vmax.xlane.f32.xlu0 %v977
  %v979 = vpop.xlane.xlu0 %978
  %vm980 = vcmp.eq.f32.partialorder %v816, %v979
  %v981 = vsel %vm980, %v821, 128
  %v982 = vsel %vm822, %v981, 2147483647
  %v983 = vand.u32 %v982, 65535
  %v984 = vshra.s32 %v982, 16
  %v985 = vcvt.s32.f32 %v983
  %v986 = vcvt.s32.f32 %v984
  %987 = vmin.xlane.f32.xlu0 %v986
  %v988 = vpop.xlane.xlu0 %987
  %vm989 = vcmp.eq.f32.partialorder %v986, %v988
  %v990 = vsel %vm989, %v985, inf
  %991 = vmin.xlane.f32.xlu0 %v990
  %v992 = vpop.xlane.xlu0 %991
  %v993 = vcvt.f32.s32 %v992
  %v994 = vcvt.f32.s32 %v988
  %v995 = vshll.u32 %v994, 16
  %v996 = vadd.s32 %v995, %v993
  %vm997 = vcmp.eq.s32.totalorder %v821, 7
  %v998 = vsel %vm997, %v996, %v976
  %999 = vst [vmem:[%s6] sm:$0x3] %v998
  // Predicated region
  $region22: #{_forward_impl.1} parent=0 // pred_check
    _
  $region23: #{_forward_impl.1} parent=0 // pred_check_branch
    %1001 = sbr.rel (0) target = $region25
  $region24: #{_forward_impl.1} parent=0 // pred_region
    _
  $region25: #{_forward_impl.1} parent=0 // pred_fallthru
    _
  // Predicated region
  $region26: #{_forward_impl.1} parent=0 // pred_check
    _
  $region27: #{_forward_impl.1} parent=0 // pred_check_branch
    %1003 = sbr.rel (0) target = $region29
  $region28: #{_forward_impl.1} parent=0 // pred_region
    _
  $region29: #{_forward_impl.1} parent=0 // pred_fallthru
    _
  // Predicated region
  $region30: #{_forward_impl.1} parent=0 // pred_check
    _
  $region31: #{_forward_impl.1} parent=0 // pred_check_branch
    %1005 = sbr.rel (0) target = $region33
  $region32: #{_forward_impl.1} parent=0 // pred_region
    _
  $region33: #{_forward_impl.1} parent=0 // pred_fallthru
    _
  // Predicated region
  $region34: #{_forward_impl.1} parent=0 // pred_check
    _
  $region35: #{_forward_impl.1} parent=0 // pred_check_branch
    %1007 = sbr.rel (0) target = $region37
  $region36: #{_forward_impl.1} parent=0 // pred_region
    _
  $region37: #{_forward_impl.1} parent=0 // pred_fallthru
    _

</llo_original>
